<compile_context>
chip_gen: v7x
topology: tpu7x:2x2x1
jax: 0.10.0
libtpu: 0.0.40
codegen_flags: <defaults>
</compile_context>

<pallas_src>
import functools
import math
from typing import NamedTuple

import jax
import jax.numpy as jnp
from jax import lax
from jax.experimental import pallas as pl
from jax.experimental.pallas import tpu as pltpu

_EPS = 1e-12


# ------------------------------- helpers --------------------------------------

def _round_up(n, mult):
    return ((n + mult - 1) // mult) * mult


def _pow2_floor(n):
    return 1 << (int(n).bit_length() - 1)


def _next_pow2(n):
    return 1 << max(0, (int(n) - 1).bit_length())


def _vmem_capacity_bytes():
    try:
        cap = getattr(pltpu.get_tpu_info(), "vmem_capacity_bytes", None)
        if cap:
            return int(cap)
    except Exception:
        pass
    return 64 << 20                     # conservative: v7x per-TensorCore VMEM


def _default_limits():
    """(vmem_limit_bytes, default class-tile size) per TPU generation."""
    cap = _vmem_capacity_bytes()
    if cap <= (64 << 20):               # v7x: 64 MiB per TensorCore
        return 40 << 20, 1024
    return 64 << 20, 2048               # v5e / v6e: 128 MiB


# ------------------------------- kernel ----------------------------------------

def _arc_margin_kernel(x_ref, w_ref, label_ref, out_ref, *, s, cos_m, sin_m, th,
                       mm, easy_margin, ls_eps, out_features, block_c):
    # Both operands arrive pre-normalized; W is already (D, tc) so the MXU sees
    # a canonical (M, K) x (K, N) contraction with f32 accumulation.
    cosine = jnp.dot(x_ref[...], w_ref[...], preferred_element_type=jnp.float32)

    # phi = cos(theta + m); clamp the sqrt argument so rounding never NaNs.
    sine = jnp.sqrt(jnp.maximum(1.0 - cosine * cosine, 0.0))
    phi = cosine * cos_m - sine * sin_m
    if easy_margin:
        phi = jnp.where(cosine > 0.0, phi, cosine)
    else:
        phi = jnp.where(cosine > th, phi, cosine - mm)

    # one-hot on this class tile: constant lane iota vs (label - tile offset),
    # i.e. the per-step work is a (tb, 1) scalar subtract + one full-tile compare.
    lane = lax.broadcasted_iota(jnp.int32, cosine.shape, 1)
    local_label = label_ref[...] - pl.program_id(1) * block_c        # (tb, 1)
    hit = lane == local_label                                        # (tb, tc)

    if ls_eps > 0.0:
        one_hot = (1.0 - ls_eps) * hit.astype(jnp.float32) + (ls_eps / out_features)
        out = (cosine + one_hot * (phi - cosine)) * s
    else:
        out = jnp.where(hit, phi, cosine) * s                        # single select
    out_ref[...] = out.astype(out_ref.dtype)


# --------------------------- weight preparation --------------------------------

class PreparedWeight(NamedTuple):
    w_t: jax.Array        # (in_features, padded_out_features): normalized, transposed
    out_features: int     # original out_features (C)
    block_c: int          # class-tile size the padding is aligned to (pow2 * 128)


def prepare_arc_margin_weight(weight, *, compute_dtype=jnp.bfloat16, block_c=None):
    """Normalize (F.normalize, eps=1e-12), transpose to (D, cp), pad the class
    axis and cast to compute_dtype — once — so repeated forwards skip the per-call
    C*D normalize/cast HBM passes."""
    weight = jnp.asarray(weight, jnp.float32)
    C, D = weight.shape
    if block_c is None:
        _, block_c = _default_limits()
    # Snap to a power-of-two multiple of 128 (keeps halving legal) and do not
    # over-pad small class counts.
    block_c = max(128, 128 * _pow2_floor(max(1, int(block_c) // 128)))
    block_c = min(block_c, 128 * _next_pow2(pl.cdiv(C, 128)))
    cp = _round_up(C, block_c)

    inv_w = 1.0 / jnp.maximum(jnp.linalg.norm(weight, axis=-1, keepdims=True), _EPS)
    w_t = jnp.pad(weight * inv_w, ((0, cp - C), (0, 0))).T.astype(compute_dtype)
    return PreparedWeight(w_t, int(C), int(block_c))


# ------------------------------- entry point ------------------------------------

def arc_margin_product(x, weight, label, *, s=30.0, m=0.5, easy_margin=False,
                       ls_eps=0.0, compute_dtype=jnp.bfloat16,
                       out_dtype=jnp.float32, block_b=None, block_c=None,
                       vmem_limit_bytes=None):
    """JAX/Pallas equivalent of ArcMarginProduct.forward(input, label).

    `weight` may be a raw (out_features, in_features) array or a PreparedWeight
    (cached normalize/transpose/pad/cast) for repeated calls.  When a
    PreparedWeight is given its dtype overrides `compute_dtype`.
    """
    x = jnp.asarray(x, jnp.float32)
    B, D = x.shape

    default_limit, _ = _default_limits()
    if vmem_limit_bytes is None:
        vmem_limit_bytes = default_limit

    if isinstance(weight, PreparedWeight):
        prep = weight
    else:
        prep = prepare_arc_margin_weight(weight, compute_dtype=compute_dtype,
                                         block_c=block_c)
    w_t, C, tc_prep = prep
    assert w_t.shape[0] == D, "in_features mismatch"
    cp = w_t.shape[1]
    compute_dtype = w_t.dtype
    in_itemsize = jnp.dtype(compute_dtype).itemsize
    out_itemsize = jnp.dtype(out_dtype).itemsize

    # ---- tile selection -------------------------------------------------------
    # tb covers the whole batch when possible (W then read from HBM exactly once,
    # clearing the bf16 compute-bound knee on all generations); tc as large as
    # VMEM allows to amortize per-step pipeline overhead.  Shrink tc first
    # (preserves W reuse), then tb.
    row_align = (8 * 4) // in_itemsize          # 8 rows for f32, 16 for bf16 packing
    tb_cap = 1024 if block_b is None else int(block_b)
    tb = min(_round_up(B, row_align), _round_up(tb_cap, row_align))

    if block_c is not None:
        tc = max(128, 128 * _pow2_floor(max(1, int(block_c) // 128)))
        tc = min(tc, tc_prep)                   # must divide the prepared padding
    else:
        tc = tc_prep

    def tiles_vmem(tb_, tc_):                   # double-buffered x, W, out, label
        return 2 * (tb_ * D * in_itemsize + D * tc_ * in_itemsize
                    + tb_ * tc_ * out_itemsize + tb_ * 4)

    budget = max(4 << 20, int(vmem_limit_bytes) - (4 << 20))
    while tiles_vmem(tb, tc) > budget and tc > 128:
        tc //= 2                                # stays a pow2 multiple of 128
    while tiles_vmem(tb, tc) > budget and tb > row_align:
        tb = max(row_align, _round_up(tb // 2, row_align))

    bp = _round_up(B, tb)
    grid = (bp // tb, cp // tc)

    # ---- operand prep: the F.normalize scale folds into the pad/cast pass ------
    inv_x = 1.0 / jnp.maximum(jnp.linalg.norm(x, axis=-1, keepdims=True), _EPS)
    x_p = jnp.pad(x * inv_x, ((0, bp - B), (0, 0))).astype(compute_dtype)   # (bp, D)
    label_p = jnp.pad(jnp.asarray(label, jnp.int32).reshape(-1),
                      (0, bp - B)).reshape(bp, 1)                           # (bp, 1)

    kernel = functools.partial(
        _arc_margin_kernel,
        s=float(s), cos_m=math.cos(m), sin_m=math.sin(m),
        th=math.cos(math.pi - m), mm=math.sin(math.pi - m) * m,
        easy_margin=bool(easy_margin), ls_eps=float(ls_eps),
        out_features=int(C), block_c=int(tc))

    cost = pl.CostEstimate(
        flops=int(2 * bp * cp * D + 10 * bp * cp),
        transcendentals=int(bp * cp),
        bytes_accessed=int(bp * D * in_itemsize             # x read once (resident over j)
                           + grid[0] * cp * D * in_itemsize # W read once per batch tile
                           + bp * cp * out_itemsize         # logits write
                           + bp * 4))                       # labels

    out = pl.pallas_call(
        kernel,
        out_shape=jax.ShapeDtypeStruct((bp, cp), out_dtype),
        grid_spec=pltpu.PrefetchScalarGridSpec(
            num_scalar_prefetch=0,
            grid=grid,
            in_specs=[
                pl.BlockSpec((tb, D), lambda i, j: (i, 0)),    # x tile (resident over j)
                pl.BlockSpec((D, tc), lambda i, j: (0, j)),    # W tile, (K, N) MXU layout
                pl.BlockSpec((tb, 1), lambda i, j: (i, 0)),    # labels per row
            ],
            out_specs=pl.BlockSpec((tb, tc), lambda i, j: (i, j)),
        ),
        compiler_params=pltpu.CompilerParams(
            dimension_semantics=("parallel", "parallel"),
            vmem_limit_bytes=int(vmem_limit_bytes),
        ),
        cost_estimate=cost,
    )(x_p, w_t, label_p)

    return out[:B, :C]


# ------------------------------- references -------------------------------------

def _margin_from_cosine(cosine, label, out_features, *, s=30.0, m=0.5,
                        easy_margin=False, ls_eps=0.0):
    sine = jnp.sqrt(jnp.maximum(1.0 - cosine ** 2, 0.0))
    phi = cosine * math.cos(m) - sine * math.sin(m)
    if easy_margin:
        phi = jnp.where(cosine > 0, phi, cosine)
    else:
        phi = jnp.where(cosine > math.cos(math.pi - m),
                        phi, cosine - math.sin(math.pi - m) * m)
    one_hot = jax.nn.one_hot(label, out_features, dtype=jnp.float32)
    if ls_eps > 0:
        one_hot = (1 - ls_eps) * one_hot + ls_eps / out_features
    return (one_hot * phi + (1.0 - one_hot) * cosine) * s


def _reference(x, weight, label, **kw):
    """Pure-JAX mirror of the PyTorch module (normalize-then-linear)."""
    xn = x / jnp.maximum(jnp.linalg.norm(x, axis=-1, keepdims=True), _EPS)
    wn = weight / jnp.maximum(jnp.linalg.norm(weight, axis=-1, keepdims=True), _EPS)
    cosine = jnp.dot(xn, wn.T, precision=lax.Precision.HIGHEST)
    return _margin_from_cosine(cosine, label, weight.shape[0], **kw)


def _kernel_consistent_cosine(x, weight, compute_dtype):
    """Cosine exactly the way the kernel computes it: normalize in f32, round
    the operands to compute_dtype, dense dot with f32 accumulation."""
    xn = x / jnp.maximum(jnp.linalg.norm(x, axis=-1, keepdims=True), _EPS)
    wn = weight / jnp.maximum(jnp.linalg.norm(weight, axis=-1, keepdims=True), _EPS)
    xr = xn.astype(compute_dtype).astype(jnp.float32)
    wr = wn.astype(compute_dtype).astype(jnp.float32)
    return jnp.dot(xr, wr.T, precision=lax.Precision.HIGHEST)


# --------------------------------- demo ------------------------------------------

if __name__ == "__main__":
    key = jax.random.PRNGKey(0)
    k1, k2, k3, k4, k5, k6 = jax.random.split(key, 6)

    # Case 1: small single-tile problem, f32 MXU path.
    B, D, C = 8, 32, 16
    x = jax.random.normal(k1, (B, D), jnp.float32)
    bound = math.sqrt(6.0 / (D + C))                    # xavier_uniform_ on (C, D)
    w = jax.random.uniform(k2, (C, D), jnp.float32, minval=-bound, maxval=bound)
    lbl = jax.random.randint(k3, (B,), 0, C, jnp.int32)

    out1 = jax.block_until_ready(arc_margin_product(x, w, lbl, compute_dtype=jnp.float32))
    assert out1.shape == (B, C)
    tight1 = _margin_from_cosine(_kernel_consistent_cosine(x, w, jnp.float32), lbl, C)
    assert jnp.allclose(out1, tight1, atol=2e-3, rtol=1e-3), "f32 single-tile mismatch"
    assert jnp.allclose(out1, _reference(x, w, lbl), atol=0.3), "f32 semantic mismatch"

    # Case 2: multi-tile (3 x 3) grid with padding on both axes + label smoothing.
    B2, D2, C2 = 44, 64, 300
    x2 = jax.random.normal(k4, (B2, D2), jnp.float32)
    w2 = 0.05 * jax.random.normal(k5, (C2, D2), jnp.float32)
    l2 = jax.random.randint(k6, (B2,), 0, C2, jnp.int32)

    out2 = jax.block_until_ready(arc_margin_product(
        x2, w2, l2, ls_eps=0.1, compute_dtype=jnp.float32, block_b=16, block_c=128))
    assert out2.shape == (B2, C2)
    tight2 = _margin_from_cosine(_kernel_consistent_cosine(x2, w2, jnp.float32),
                                 l2, C2, ls_eps=0.1)
    assert jnp.allclose(out2, tight2, atol=2e-3, rtol=1e-3), "multi-tile mismatch"
    assert jnp.allclose(out2, _reference(x2, w2, l2, ls_eps=0.1), atol=0.3), \
        "multi-tile semantic mismatch"

    # Case 3: default bf16 MXU path (checked against bf16-rounded normalized operands).
    out3 = jax.block_until_ready(arc_margin_product(x, w, lbl))   # compute_dtype=bf16
    tight3 = _margin_from_cosine(_kernel_consistent_cosine(x, w, jnp.bfloat16), lbl, C)
    assert jnp.allclose(out3, tight3, atol=2e-3, rtol=1e-3), "bf16 path mismatch"
    assert jnp.allclose(out3, _reference(x, w, lbl), atol=0.3), "bf16 semantic mismatch"

    # Case 4: cached / prepared-weight path (skips the per-call C*D normalize+cast).
    prep = prepare_arc_margin_weight(w, compute_dtype=jnp.float32)
    out4 = jax.block_until_ready(arc_margin_product(x, prep, lbl))
    assert out4.shape == (B, C)
    assert jnp.allclose(out4, tight1, atol=2e-3, rtol=1e-3), "prepared-weight mismatch"

    print("KERNEL_OK")
</pallas_src>

<mosaic_0001>
module attributes {stable_mosaic.version = 11 : i64} {
  func.func @_arc_margin_kernel(%arg0: i32, %arg1: i32, %arg2: memref<8x32xf32, #tpu.memory_space<vmem>>, %arg3: memref<32x128xf32, #tpu.memory_space<vmem>>, %arg4: memref<8x1xi32, #tpu.memory_space<vmem>>, %arg5: memref<8x128xf32, #tpu.memory_space<vmem>>) attributes {dimension_semantics = [#tpu.dimension_semantics<parallel>, #tpu.dimension_semantics<parallel>], iteration_bounds = array<i64: 1, 1>, scalar_prefetch = 0 : i64, scratch_operands = 0 : i64, tpu.core_type = #tpu.core_type<tc>, window_params = [{transform_indices = @transform_0, window_bounds = array<i64: 8, 32>}, {transform_indices = @transform_1, window_bounds = array<i64: 32, 128>}, {transform_indices = @transform_2, window_bounds = array<i64: 8, 1>}, {transform_indices = @transform_3, window_bounds = array<i64: 8, 128>}]} {
    %c0 = arith.constant 0 : index
    %c0_0 = arith.constant 0 : index
    %0 = vector.load %arg2[%c0, %c0_0] : memref<8x32xf32, #tpu.memory_space<vmem>>, vector<8x32xf32>
    %c0_1 = arith.constant 0 : index
    %c0_2 = arith.constant 0 : index
    %1 = vector.load %arg3[%c0_1, %c0_2] : memref<32x128xf32, #tpu.memory_space<vmem>>, vector<32x128xf32>
    %cst = arith.constant dense<0.000000e+00> : vector<8x128xf32>
    %2 = tpu.matmul %0, %1, %cst {dimension_numbers = #tpu.dot_dimension_numbers<[1], [0], [0], [1], [0, 0, 1, 1], [], []>} : vector<8x32xf32>, vector<32x128xf32>, vector<8x128xf32> -> vector<8x128xf32>
    %3 = arith.mulf %2, %2 : vector<8x128xf32>
    %cst_3 = arith.constant 1.000000e+00 : f32
    %4 = vector.broadcast %cst_3 : f32 to vector<8x128xf32>
    %5 = arith.subf %4, %3 : vector<8x128xf32>
    %cst_4 = arith.constant 0.000000e+00 : f32
    %6 = vector.broadcast %cst_4 : f32 to vector<8x128xf32>
    %7 = arith.maximumf %5, %6 : vector<8x128xf32>
    %8 = math.sqrt %7 : vector<8x128xf32>
    %cst_5 = arith.constant 0.87758255 : f32
    %9 = vector.broadcast %cst_5 : f32 to vector<8x128xf32>
    %10 = arith.mulf %2, %9 : vector<8x128xf32>
    %cst_6 = arith.constant 0.47942555 : f32
    %11 = vector.broadcast %cst_6 : f32 to vector<8x128xf32>
    %12 = arith.mulf %8, %11 : vector<8x128xf32>
    %13 = arith.subf %10, %12 : vector<8x128xf32>
    %cst_7 = arith.constant -0.87758255 : f32
    %14 = vector.broadcast %cst_7 : f32 to vector<8x128xf32>
    %15 = arith.cmpf ogt, %2, %14 : vector<8x128xf32>
    %cst_8 = arith.constant 0.239712775 : f32
    %16 = vector.broadcast %cst_8 : f32 to vector<8x128xf32>
    %17 = arith.subf %2, %16 : vector<8x128xf32>
    %18 = arith.select %15, %13, %17 : vector<8x128xi1>, vector<8x128xf32>
    %19 = tpu.iota {dimensions = array<i32: 1>} : vector<8x128xi32>
    %c0_9 = arith.constant 0 : index
    %c0_10 = arith.constant 0 : index
    %20 = vector.load %arg4[%c0_9, %c0_10] : memref<8x1xi32, #tpu.memory_space<vmem>>, vector<8x1xi32>
    %c128_i32 = arith.constant 128 : i32
    %21 = arith.muli %arg1, %c128_i32 : i32
    %22 = vector.broadcast %21 : i32 to vector<8x1xi32>
    %23 = arith.subi %20, %22 : vector<8x1xi32>
    %24 = vector.broadcast %23 : vector<8x1xi32> to vector<8x128xi32>
    %25 = arith.cmpi eq, %19, %24 : vector<8x128xi32>
    %26 = arith.select %25, %18, %2 : vector<8x128xi1>, vector<8x128xf32>
    %cst_11 = arith.constant 3.000000e+01 : f32
    %27 = vector.broadcast %cst_11 : f32 to vector<8x128xf32>
    %28 = arith.mulf %26, %27 : vector<8x128xf32>
    %c0_12 = arith.constant 0 : index
    %c0_13 = arith.constant 0 : index
    %29 = vector.load %arg5[%c0_12, %c0_13] : memref<8x128xf32, #tpu.memory_space<vmem>>, vector<8x128xf32>
    tpu.vector_store %arg5[%c0_12, %c0_13], %28 {strides = array<i32>} : memref<8x128xf32, #tpu.memory_space<vmem>>, vector<8x128xf32>,
    return
  }
  func.func @transform_0(%arg0: i32, %arg1: i32) -> (i32, i32) {
    %c0_i32 = arith.constant 0 : i32
    %c0_i32_0 = arith.constant 0 : i32
    return %arg0, %c0_i32 : i32, i32
  }
  func.func @transform_1(%arg0: i32, %arg1: i32) -> (i32, i32) {
    %c0_i32 = arith.constant 0 : i32
    %c0_i32_0 = arith.constant 0 : i32
    return %c0_i32, %arg1 : i32, i32
  }
  func.func @transform_2(%arg0: i32, %arg1: i32) -> (i32, i32) {
    %c0_i32 = arith.constant 0 : i32
    %c0_i32_0 = arith.constant 0 : i32
    return %arg0, %c0_i32 : i32, i32
  }
  func.func @transform_3(%arg0: i32, %arg1: i32) -> (i32, i32) {
    %c0_i32 = arith.constant 0 : i32
    return %arg0, %arg1 : i32, i32
  }
}

</mosaic_0001>

<llo_original>
// kernel: tpu_custom_call.1
$region0: #{tpu_custom_call.1}
  #allocation0 [shape = 'u32[]', space=smem, size = 0x4, offset = 0x4, fixed_abs, tag = 'smem constant byte address 0x4 - core index']
  #allocation1 [shape = 'u32[144,128]{1,0:T(1,128)}', space=vmem, size = 0x12000, scoped, tag = 'internal scratch']
  %s0 = inlined_call_operand.vmem [shape: f32[8,32], index: 0, kind: input, shape index: {}]
  %s1 = inlined_call_operand.hbm [shape: f32[32,128], index: 1, kind: input, shape index: {}]
  %s2 = inlined_call_operand.vmem [shape: s32[8,1], index: 2, kind: input, shape index: {}]
  %s3 = inlined_call_operand.hbm [shape: f32[8,128], index: 3, kind: output, shape index: {}]
  %s4 = sld [smem:[#allocation0]]
  $region26: #{tpu_custom_call.1} parent=0
    _
  %s6 = ssub.s32 1, %s4
  %s7 = scalar_select 0, %s6, %s4
  $region1: #{tpu_custom_call.1} parent=0
    #allocation2 [shape = 'u8[16384]{0}', space=vmem, size = 0x4000, scoped, tag = 'input window, operand 1, single buffered']
    #allocation3 [shape = 's32[1]{0}', space=sflag, size = 0x4, scoped, tag = 'scoped memory for tpu_custom_call.1']
    #allocation4 [shape = 's32[1]{0}', space=sflag, size = 0x4, scoped, tag = 'scoped memory for tpu_custom_call.1']
    #allocation5 [shape = 'u8[4096]{0}', space=vmem, size = 0x1000, scoped, tag = 'output window, operand 0, single buffered']
    %8 = vsyncpa [#allocation3], 0
    %9 = vsyncpa [#allocation4], 0
    // Predicated region
    $region2: #{tpu_custom_call.1} parent=1 // pred_check
      _
    $region3: #{tpu_custom_call.1} parent=1 // pred_check_branch
      %11 = sbr.rel (0) target = $region5
    $region4: #{tpu_custom_call.1} parent=1 // pred_region
      _
    $region5: #{tpu_custom_call.1} parent=1 // pred_fallthru
      _
    // Predicated region
    $region6: #{tpu_custom_call.1} parent=1 // pred_check
      _
    $region7: #{tpu_custom_call.1} parent=1 // pred_check_branch
      %13 = sbr.rel (0) target = $region9
    $region8: #{tpu_custom_call.1} parent=1 // pred_region
      %s15 = ssub.s32 512, 512
      %16 = vsyncadd [#allocation3], %s15
      %s17 = sshll.u32 [#allocation2], 4
      %s18 = int_to_ptr.vmem [resolvable:$true] %s17
      %23 = dma.hbm_to_vmem [thread:$0]  %s1, 512, %s18, [#allocation3], 128, 128, 8
    $region9: #{tpu_custom_call.1} parent=1 // pred_fallthru
      _
    // Predicated region
    $region10: #{tpu_custom_call.1} parent=1 // pred_check
      _
    $region11: #{tpu_custom_call.1} parent=1 // pred_check_branch
      %25 = sbr.rel (0) target = $region13
    $region12: #{tpu_custom_call.1} parent=1 // pred_region
      _
    $region13: #{tpu_custom_call.1} parent=1 // pred_fallthru
      _
    // Predicated region
    $region14: #{tpu_custom_call.1} parent=1 // pred_check
      _
    $region15: #{tpu_custom_call.1} parent=1 // pred_check_branch
      %27 = sbr.rel (0) target = $region17
    $region16: #{tpu_custom_call.1} parent=1 // pred_region
      %28 = dma.done [#allocation3], 512
    $region17: #{tpu_custom_call.1} parent=1 // pred_fallthru
      _
    %v29 = vld [vmem:[%s0] sm:$0xff]
    %v30 = vld [vmem:[#allocation2] sm:$0xff]
    %v31 = vld [vmem:[#allocation2 + $0x8] sm:$0xff]
    %v32 = vld [vmem:[#allocation2 + $0x10] sm:$0xff]
    %v33 = vld [vmem:[#allocation2 + $0x18] sm:$0xff]
    %vm34 = vcmask 261120
    %v36 = vsel %vm34, %v29, 0
    %38 = vmatprep.subr.mxu0 0.0
    %39 = vmatpush1.msra.mxu0 %v30
    %40 = vmatprep.subr.mxu0 0.0
    %41 = vmatpush1.msra.mxu0 %v31
    %42 = vmatprep.subr.mxu0 0.0
    %43 = vmatpush1.msra.mxu0 %v32
    %44 = vmatprep.subr.mxu0 0.0
    %45 = vmatpush1.msra.mxu0 %v33
    %46 = vmatprep.subr.mxu0 0.0
    %47 = vmatpush1.msra.mxu0 0.0
    %48 = vmatprep.subr.mxu0 0.0
    %49 = vmatpush1.msra.mxu0 0.0
    %50 = vmatprep.subr.mxu0 0.0
    %51 = vmatpush1.msra.mxu0 0.0
    %52 = vmatprep.subr.mxu0 0.0
    %53 = vmatpush1.msra.mxu0 0.0
    %54 = vmatprep.subr.mxu0 0.0
    %55 = vmatpush1.msra.mxu0 0.0
    %56 = vmatprep.subr.mxu0 0.0
    %57 = vmatpush1.msra.mxu0 0.0
    %58 = vmatprep.subr.mxu0 0.0
    %59 = vmatpush1.msra.mxu0 0.0
    %60 = vmatprep.subr.mxu0 0.0
    %61 = vmatpush1.msra.mxu0 0.0
    %62 = vmatprep.subr.mxu0 0.0
    %63 = vmatpush1.msra.mxu0 0.0
    %64 = vmatprep.subr.mxu0 0.0
    %65 = vmatpush1.msra.mxu0 0.0
    %66 = vmatprep.subr.mxu0 0.0
    %67 = vmatpush1.msra.mxu0 0.0
    %68 = vmatprep.subr.mxu0 0.0
    %69 = vmatpush1.msra.mxu0 0.0
    %70 = vmatprep.subr.mxu0 0.0
    %71 = vmatpush1.msra.mxu0 0.0
    %72 = vmatprep.subr.mxu0 0.0
    %73 = vmatpush1.msra.mxu0 0.0
    %74 = vmatprep.subr.mxu0 0.0
    %75 = vmatpush1.msra.mxu0 0.0
    %76 = vmatprep.subr.mxu0 0.0
    %77 = vmatpush1.msra.mxu0 0.0
    %78 = vmatprep.subr.mxu0 0.0
    %79 = vmatpush1.msra.mxu0 0.0
    %80 = vmatprep.subr.mxu0 0.0
    %81 = vmatpush1.msra.mxu0 0.0
    %82 = vmatprep.subr.mxu0 0.0
    %83 = vmatpush1.msra.mxu0 0.0
    %84 = vmatprep.subr.mxu0 0.0
    %85 = vmatpush1.msra.mxu0 0.0
    %86 = vmatprep.subr.mxu0 0.0
    %87 = vmatpush1.msra.mxu0 0.0
    %88 = vmatprep.subr.mxu0 0.0
    %89 = vmatpush1.msra.mxu0 0.0
    %90 = vmatprep.subr.mxu0 0.0
    %91 = vmatpush1.msra.mxu0 0.0
    %92 = vmatprep.subr.mxu0 0.0
    %93 = vmatpush1.msra.mxu0 0.0
    %94 = vmatprep.subr.mxu0 0.0
    %95 = vmatpush1.msra.mxu0 0.0
    %96 = vmatprep.subr.mxu0 0.0
    %97 = vmatpush1.msra.mxu0 0.0
    %98 = vmatprep.subr.mxu0 0.0
    %99 = vmatpush1.msra.mxu0 0.0
    %100 = vmatprep.subr.mxu0 0.0
    %101 = vmatpush1.msra.mxu0 0.0
    %102 = vmatprep.mubr.f32.mxu0 0.0
    %103 = vmatmul.mubr.f32.gmra.mrb[0].mxu0 %v36
    %v104 = vpop.f32.mrb[0].mxu0
    %v105 = vadd.f32 0.0, %v104
    %v106 = vpop.f32.mrb[0].mxu0
    %107 = vdwg.mxu0
    %v108 = vmul.f32 %v105, %v105
    %v109 = vsub.f32 1.0, %v108
    %v110 = vmax.f32 %v109, 0.0
    %v111 = vrsqrt.pop %v110
    %v112 = vmul.f32 %v110, %v111
    %vm113 = vcmp.eq.f32.partialorder %v110, inf
    %v114 = vsel %vm113, %v110, %v112
    %vm115 = vcmp.eq.f32.partialorder %v110, 0.0
    %v116 = vand.u32 %v110, 2147483648
    %v117 = vsel %vm115, %v116, %v114
    %v118 = vmul.f32 %v105, 0.87758255
    %v119 = vmul.f32 %v117, 0.47942555
    %v120 = vsub.f32 %v118, %v119
    %vm121 = vcmp.gt.f32.partialorder %v105, -0.87758255
    %v122 = vsub.f32 %v105, 0.23971277
    %v123 = vsel %vm121, %v120, %v122
    %v124 = vlaneseq
    %v125 = vand.u32 %v124, 127
    %v126 = vld [vmem:[%s2] sm:$0xff]
    %s127 = smul.u32 0, 128
    %v128 = vstv %s127
    %v129 = vsub.s32 %v126, %v128
    %130 = vset.pattern.permute.xlu0 0
    %131 = vperm.xlu0 %130, %v129
    %v132 = vpop.permute.xlu0 %131
    %vm133 = vcmp.eq.s32.totalorder %v125, %v132
    %v134 = vsel %vm133, %v123, %v105
    %v135 = vmul.f32 %v134, 30.0
    %136 = vst [vmem:[#allocation5] sm:$0xff] %v135
    // Predicated region
    $region18: #{tpu_custom_call.1} parent=1 // pred_check
      _
    $region19: #{tpu_custom_call.1} parent=1 // pred_check_branch
      %138 = sbr.rel (0) target = $region21
    $region20: #{tpu_custom_call.1} parent=1 // pred_region
      %s140 = ssub.s32 128, 128
      %141 = vsyncadd [#allocation4], %s140
      %s143 = sshll.u32 [#allocation5], 4
      %s144 = int_to_ptr.vmem [resolvable:$true] %s143
      %146 = dma.vmem_to_hbm [thread:$0]  %s144, 128, %s3, [#allocation4]
    $region21: #{tpu_custom_call.1} parent=1 // pred_fallthru
      _
    // Predicated region
    $region22: #{tpu_custom_call.1} parent=1 // pred_check
      _
    $region23: #{tpu_custom_call.1} parent=1 // pred_check_branch
      %148 = sbr.rel (0) target = $region25
    $region24: #{tpu_custom_call.1} parent=1 // pred_region
      %149 = dma.done [#allocation4], 128
    $region25: #{tpu_custom_call.1} parent=1 // pred_fallthru
      _
    %150 = vsyncpa [#allocation3], 1
    %151 = vsyncpa [#allocation4], 1

</llo_original>
